<compile_context>
chip_gen: v7x
topology: tpu7x:2x2x1
jax: 0.10.0
libtpu: 0.0.40
codegen_flags: <defaults>
</compile_context>

<pallas_src>
import jax
import jax.numpy as jnp
from jax.experimental import pallas as pl
from jax.experimental.pallas import tpu as pltpu


# ---------------------------------------------------------------------------
# helpers
# ---------------------------------------------------------------------------
def _round_up(x, m):
    return ((x + m - 1) // m) * m


def _sublane_multiple(dtype):
    # f32 -> 8, bf16 -> 16, int8/fp8 -> 32
    return max(8, 32 // jnp.dtype(dtype).itemsize)


def _vmem_config():
    """Generation-aware (vmem_limit, row_tile_budget, weight_tile_budget, fused_budget)."""
    cap = None
    try:
        cap = getattr(pltpu.get_tpu_info(), "vmem_capacity_bytes", None)
    except Exception:
        cap = None
    if cap is None:
        cap = 64 * 1024 * 1024                       # conservative (v7x-sized) fallback
    if cap >= 128 * 1024 * 1024:                     # v5e / v6e: 128 MiB VMEM
        vmem_limit = 96 * 1024 * 1024
        row_budget = 12 * 1024 * 1024
        weight_budget = 24 * 1024 * 1024
    else:                                            # v7x: 64 MiB VMEM per TensorCore
        vmem_limit = 48 * 1024 * 1024
        row_budget = 5 * 1024 * 1024
        weight_budget = 12 * 1024 * 1024
    fused_budget = (3 * vmem_limit) // 4             # headroom for double buffering
    return vmem_limit, row_budget, weight_budget, fused_budget


# ---------------------------------------------------------------------------
# kernels
# ---------------------------------------------------------------------------
def _fused_kernel(x_ref, wg_ref, wl_ref, bg_ref, o_ref):
    """out[b] = x[b] @ Wg + (b_gamma - (sum_n x[b,n,:]) @ Wl)  for one batch b.

    x is read from HBM exactly once; set-sum, Lambda bias and Gamma matmul all
    happen in this body.  Accumulation and epilogue are f32.
    """
    x = x_ref[...]                                                   # (N, Din)
    xsum = jnp.sum(x.astype(jnp.float32), axis=0, keepdims=True)     # (1, Din) f32
    lam = jnp.dot(xsum, wl_ref[...],                                 # Wl kept f32
                  preferred_element_type=jnp.float32)                # (1, Dout)
    g = jnp.dot(x, wg_ref[...], preferred_element_type=jnp.float32)  # (N, Dout)
    o_ref[...] = (g + (bg_ref[...] - lam)).astype(o_ref.dtype)


def _xsum_kernel(x_ref, xsum_ref):
    """xsum[b] += sum over this row tile (f32, accumulated in the resident output block)."""
    @pl.when(pl.program_id(1) == 0)
    def _init():
        xsum_ref[...] = jnp.zeros_like(xsum_ref)

    xsum_ref[...] += jnp.sum(x_ref[...].astype(jnp.float32), axis=0, keepdims=True)


def _matmul_bias_kernel(x_ref, wg_ref, bias_ref, o_ref):
    """out_tile = x_tile @ Wg_tile + bias_eff[b] (Lambda already folded into bias)."""
    g = jnp.dot(x_ref[...], wg_ref[...], preferred_element_type=jnp.float32)
    o_ref[...] = (g + bias_ref[...]).astype(o_ref.dtype)


# ---------------------------------------------------------------------------
# parameter prep (do ONCE at init time, not per forward call)
# ---------------------------------------------------------------------------
def prepare_params(w_gamma, b_gamma, w_lambda, compute_dtype=None):
    """Transpose to (Din, Dout), pad Din/Dout to lane-dense multiples of 128.

    Wg may be cast to compute_dtype (e.g. bf16).  Wl and b_gamma are kept f32:
    the set-sum is f32-accumulated and ~N x the input magnitude, so downcasting
    it (or Wl) to bf16 would reintroduce the rounding the accumulator avoids.
    """
    w_gamma = jnp.asarray(w_gamma)
    if compute_dtype is not None:
        w_gamma = w_gamma.astype(compute_dtype)
    dout, din = w_gamma.shape
    din_p = _round_up(din, 128)
    dout_p = _round_up(dout, 128)
    wg_t = jnp.pad(w_gamma.T, ((0, din_p - din), (0, dout_p - dout)))
    wl_t = jnp.pad(jnp.asarray(w_lambda, dtype=jnp.float32).T,
                   ((0, din_p - din), (0, dout_p - dout)))
    bg = jnp.pad(jnp.asarray(b_gamma, dtype=jnp.float32).reshape(1, dout),
                 ((0, 0), (0, dout_p - dout)))
    return {"wg_t": wg_t, "wl_t": wl_t, "bg": bg, "din": int(din), "dout": int(dout)}


# ---------------------------------------------------------------------------
# forward paths
# ---------------------------------------------------------------------------
def _forward_fused(x, wg_t, wl_t, bg, N, Dout, n_sub, vmem_limit,
                   in_is, out_is, w_is, out_dtype):
    B = x.shape[0]
    Din_p, Dout_p = wg_t.shape
    if n_sub != N:
        x = jnp.pad(x, ((0, 0), (0, n_sub - N), (0, 0)))   # zero rows: sum unchanged

    cost = pl.CostEstimate(
        flops=2 * B * n_sub * Din_p * Dout_p + 2 * B * Din_p * Dout_p,
        transcendentals=0,
        bytes_accessed=(x.size * in_is + wg_t.size * w_is + wl_t.size * 4
                        + bg.size * 4 + B * n_sub * Dout_p * out_is))

    out = pl.pallas_call(
        _fused_kernel,
        out_shape=jax.ShapeDtypeStruct((B, n_sub, Dout_p), out_dtype),
        grid_spec=pltpu.PrefetchScalarGridSpec(
            num_scalar_prefetch=0,
            grid=(B,),
            in_specs=[
                pl.BlockSpec((pl.Squeezed(), n_sub, Din_p), lambda b: (b, 0, 0)),
                pl.BlockSpec((Din_p, Dout_p), lambda b: (0, 0)),
                pl.BlockSpec((Din_p, Dout_p), lambda b: (0, 0)),
                pl.BlockSpec((1, Dout_p), lambda b: (0, 0)),
            ],
            out_specs=pl.BlockSpec((pl.Squeezed(), n_sub, Dout_p),
                                   lambda b: (b, 0, 0)),
        ),
        compiler_params=pltpu.CompilerParams(
            dimension_semantics=("parallel",),
            vmem_limit_bytes=vmem_limit),
        cost_estimate=cost,
    )(x, wg_t, wl_t, bg)
    return out[:, :N, :Dout]


def _forward_tiled(x, wg_t, wl_t, bg, N, Dout, sub, vmem_limit, row_budget,
                   weight_budget, in_is, out_is, w_is, out_dtype):
    B = x.shape[0]
    Din_p, Dout_p = wg_t.shape

    # Dout tile: largest 128-multiple divisor of Dout_p whose double-buffered
    # (Din_p, tn) weight tile fits the weight budget (128 always divides Dout_p).
    m = Dout_p // 128
    tn = 128
    for d in range(m, 0, -1):
        if m % d == 0 and 2 * Din_p * (128 * d) * w_is <= weight_budget:
            tn = 128 * d
            break
    # TODO(synk): add a K (Din) reduction grid axis + f32 VMEM accumulator for
    # extreme Din where even a (Din_p, 128) weight tile would overflow VMEM.

    # Row tile: budget the real per-step footprint (double-buffered x & out
    # tiles, f32 intermediate, f32 view of the x tile for the set-sum);
    # MXU-friendly >=256 floor when the set is big enough; dtype-aware sublane
    # multiple; cdiv-style gridding via zero padding of N.
    per_row = 2 * Din_p * in_is + 2 * tn * out_is + tn * 4 + Din_p * 4
    nb = max(sub, row_budget // per_row)
    if nb >= 256:
        nb = (nb // 256) * 256
    else:
        nb = (nb // sub) * sub
    n_sub = _round_up(N, sub)
    nb = max(nb, min(256, n_sub))
    nb = min(nb, n_sub)
    N_pad = _round_up(N, nb)
    if N_pad != N:
        x = jnp.pad(x, ((0, 0), (0, N_pad - N), (0, 0)))
    nt = N_pad // nb

    # Prepass: xsum[b] = sum_n x[b, n, :]  (f32, output block resident across
    # the "arbitrary" reduction axis).
    xsum = pl.pallas_call(
        _xsum_kernel,
        out_shape=jax.ShapeDtypeStruct((B, 1, Din_p), jnp.float32),
        grid_spec=pltpu.PrefetchScalarGridSpec(
            num_scalar_prefetch=0,
            grid=(B, nt),
            in_specs=[pl.BlockSpec((pl.Squeezed(), nb, Din_p),
                                   lambda b, t: (b, t, 0))],
            out_specs=pl.BlockSpec((pl.Squeezed(), 1, Din_p),
                                   lambda b, t: (b, 0, 0)),
        ),
        compiler_params=pltpu.CompilerParams(
            dimension_semantics=("parallel", "arbitrary"),
            vmem_limit_bytes=vmem_limit),
        cost_estimate=pl.CostEstimate(
            flops=B * N_pad * Din_p, transcendentals=0,
            bytes_accessed=x.size * in_is + B * Din_p * 4),
    )(x)

    # Effective bias: one batched (B, Din) @ (Din, Dout) matmul in f32 instead
    # of B single-row MXU passes; negligible next to the main matmul.
    bias_eff = (bg - jnp.dot(xsum.reshape(B, Din_p), wl_t,
                             preferred_element_type=jnp.float32)
                ).reshape(B, 1, Dout_p)

    cost = pl.CostEstimate(
        flops=2 * B * N_pad * Din_p * Dout_p,
        transcendentals=0,
        bytes_accessed=(x.size * in_is + wg_t.size * w_is + bias_eff.size * 4
                        + B * N_pad * Dout_p * out_is))

    out = pl.pallas_call(
        _matmul_bias_kernel,
        out_shape=jax.ShapeDtypeStruct((B, N_pad, Dout_p), out_dtype),
        grid_spec=pltpu.PrefetchScalarGridSpec(
            num_scalar_prefetch=0,
            grid=(B, nt, Dout_p // tn),
            in_specs=[
                pl.BlockSpec((pl.Squeezed(), nb, Din_p), lambda b, i, j: (b, i, 0)),
                pl.BlockSpec((Din_p, tn), lambda b, i, j: (0, j)),
                pl.BlockSpec((pl.Squeezed(), 1, tn), lambda b, i, j: (b, 0, j)),
            ],
            out_specs=pl.BlockSpec((pl.Squeezed(), nb, tn),
                                   lambda b, i, j: (b, i, j)),
        ),
        compiler_params=pltpu.CompilerParams(
            dimension_semantics=("parallel", "parallel", "parallel"),
            vmem_limit_bytes=vmem_limit),
        cost_estimate=cost,
    )(x, wg_t, bias_eff)
    return out[:, :N, :Dout]


def perm_equi2_mean(x, params, *, force_path=None):
    """Forward pass of PermEqui2_mean.

    x:      (B, N, Din), f32 or bf16
    params: output of prepare_params() (pre-transposed / padded weights)
    force_path: None (auto) | "fused" | "tiled"   -- testing hook
    returns (B, N, Dout) in x's dtype
    """
    wg_t, wl_t, bg = params["wg_t"], params["wl_t"], params["bg"]
    Din, Dout = params["din"], params["dout"]
    B, N, din_x = x.shape
    assert din_x == Din, (din_x, Din)
    Din_p, Dout_p = wg_t.shape

    if x.dtype != wg_t.dtype:
        x = x.astype(wg_t.dtype)
    out_dtype = x.dtype
    in_is = jnp.dtype(x.dtype).itemsize
    out_is = jnp.dtype(out_dtype).itemsize
    w_is = jnp.dtype(wg_t.dtype).itemsize
    sub = _sublane_multiple(x.dtype)

    vmem_limit, row_budget, weight_budget, fused_budget = _vmem_config()

    # Zero-pad the feature axis (zeros change neither x @ W nor the set-sum).
    if Din_p != Din:
        x = jnp.pad(x, ((0, 0), (0, 0), (0, Din_p - Din)))

    n_sub = _round_up(N, sub)

    # Real VMEM footprint of the fused per-batch body: double-buffered x / out
    # slabs, both resident weights (x2 conservative), f32 matmul intermediate,
    # f32 view of x for the set-sum, bias row.
    fused_bytes = (2 * n_sub * Din_p * in_is
                   + 2 * n_sub * Dout_p * out_is
                   + 2 * Din_p * Dout_p * w_is
                   + 2 * Din_p * Dout_p * 4
                   + n_sub * Dout_p * 4
                   + n_sub * Din_p * 4
                   + Dout_p * 4)
    use_fused = fused_bytes <= fused_budget
    if force_path == "fused":
        use_fused = True
    elif force_path == "tiled":
        use_fused = False

    if use_fused:
        return _forward_fused(x, wg_t, wl_t, bg, N, Dout, n_sub, vmem_limit,
                              in_is, out_is, w_is, out_dtype)
    return _forward_tiled(x, wg_t, wl_t, bg, N, Dout, sub, vmem_limit,
                          row_budget, weight_budget, in_is, out_is, w_is,
                          out_dtype)


# ---------------------------------------------------------------------------
# demo / correctness checks
# ---------------------------------------------------------------------------
if __name__ == "__main__":
    key = jax.random.PRNGKey(0)

    def make_inputs(k, B, N, Din, Dout):
        kx, kg, kb, kl = jax.random.split(k, 4)
        bound = 1.0 / (Din ** 0.5)
        x = jax.random.normal(kx, (B, N, Din), dtype=jnp.float32)
        w_gamma = jax.random.uniform(kg, (Dout, Din), minval=-bound, maxval=bound,
                                     dtype=jnp.float32)
        b_gamma = jax.random.uniform(kb, (Dout,), minval=-bound, maxval=bound,
                                     dtype=jnp.float32)
        w_lambda = jax.random.uniform(kl, (Dout, Din), minval=-bound, maxval=bound,
                                      dtype=jnp.float32)
        return x, w_gamma, b_gamma, w_lambda

    def reference(x, w_gamma, b_gamma, w_lambda):
        xf = x.astype(jnp.float32)
        xm = jnp.sum(xf, axis=1, keepdims=True)                       # sum, per module
        lam = jnp.einsum("bnd,od->bno", xm, w_lambda.astype(jnp.float32))
        g = jnp.einsum("bnd,od->bno", xf, w_gamma.astype(jnp.float32)) + b_gamma
        return g - lam

    k1, k2, k3 = jax.random.split(key, 3)

    # 1) aligned shapes, f32, auto path (fused)
    x, wg, bg, wl = make_inputs(k1, 4, 16, 128, 128)
    params = prepare_params(wg, bg, wl)
    out = jax.block_until_ready(perm_equi2_mean(x, params))
    ref = reference(x, wg, bg, wl)
    assert out.shape == ref.shape
    assert jnp.allclose(out, ref, atol=1e-3, rtol=1e-3), \
        float(jnp.max(jnp.abs(out - ref)))

    # 2) unaligned shapes, f32, both paths (exercises N/Din/Dout padding + Dout tiling)
    x, wg, bg, wl = make_inputs(k2, 2, 37, 100, 136)
    params = prepare_params(wg, bg, wl)
    ref = reference(x, wg, bg, wl)
    for path in ("fused", "tiled"):
        out = jax.block_until_ready(perm_equi2_mean(x, params, force_path=path))
        assert out.shape == ref.shape
        assert jnp.allclose(out, ref, atol=1e-3, rtol=1e-3), \
            (path, float(jnp.max(jnp.abs(out - ref))))

    # 3) bf16 I/O (f32 accumulation, Wl/bias kept f32), loose tolerance
    x, wg, bg, wl = make_inputs(k3, 2, 24, 128, 256)
    xb = x.astype(jnp.bfloat16)
    params = prepare_params(wg, bg, wl, compute_dtype=jnp.bfloat16)
    out = jax.block_until_ready(perm_equi2_mean(xb, params))
    ref = reference(xb, wg.astype(jnp.bfloat16), bg, wl)
    assert out.dtype == jnp.bfloat16 and out.shape == ref.shape
    assert jnp.allclose(out.astype(jnp.float32), ref, atol=1e-1, rtol=5e-2), \
        float(jnp.max(jnp.abs(out.astype(jnp.float32) - ref)))

    print("KERNEL_OK")
</pallas_src>

<mosaic_0001>
module attributes {stable_mosaic.version = 11 : i64} {
  func.func @_fused_kernel(%arg0: i32, %arg1: memref<1x16x128xf32, #tpu.memory_space<vmem>>, %arg2: memref<128x128xf32, #tpu.memory_space<vmem>>, %arg3: memref<128x128xf32, #tpu.memory_space<vmem>>, %arg4: memref<1x128xf32, #tpu.memory_space<vmem>>, %arg5: memref<1x16x128xf32, #tpu.memory_space<vmem>>) attributes {dimension_semantics = [#tpu.dimension_semantics<parallel>], iteration_bounds = array<i64: 4>, scalar_prefetch = 0 : i64, scratch_operands = 0 : i64, tpu.core_type = #tpu.core_type<tc>, window_params = [{transform_indices = @transform_0, window_bounds = array<i64: 1, 16, 128>}, {pipeline_mode = #tpu.pipeline_mode<synchronous>, transform_indices = @transform_1, window_bounds = array<i64: 128, 128>}, {pipeline_mode = #tpu.pipeline_mode<synchronous>, transform_indices = @transform_2, window_bounds = array<i64: 128, 128>}, {pipeline_mode = #tpu.pipeline_mode<synchronous>, transform_indices = @transform_3, window_bounds = array<i64: 1, 128>}, {transform_indices = @transform_4, window_bounds = array<i64: 1, 16, 128>}]} {
    %c0 = arith.constant 0 : index
    %c0_0 = arith.constant 0 : index
    %c0_1 = arith.constant 0 : index
    %0 = vector.load %arg1[%c0, %c0_0, %c0_1] : memref<1x16x128xf32, #tpu.memory_space<vmem>>, vector<1x16x128xf32>
    %1 = vector.shape_cast %0 : vector<1x16x128xf32> to vector<16x128xf32>
    %cst = arith.constant dense<0.000000e+00> : vector<128xf32>
    %2 = vector.multi_reduction <add>, %1, %cst [0] : vector<16x128xf32> to vector<128xf32>
    %3 = vector.shape_cast %2 : vector<128xf32> to vector<1x128xf32>
    %c0_2 = arith.constant 0 : index
    %c0_3 = arith.constant 0 : index
    %4 = vector.load %arg3[%c0_2, %c0_3] : memref<128x128xf32, #tpu.memory_space<vmem>>, vector<128x128xf32>
    %cst_4 = arith.constant dense<0.000000e+00> : vector<1x128xf32>
    %5 = tpu.matmul %3, %4, %cst_4 {dimension_numbers = #tpu.dot_dimension_numbers<[1], [0], [0], [1], [0, 0, 1, 1], [], []>} : vector<1x128xf32>, vector<128x128xf32>, vector<1x128xf32> -> vector<1x128xf32>
    %c0_5 = arith.constant 0 : index
    %c0_6 = arith.constant 0 : index
    %6 = vector.load %arg2[%c0_5, %c0_6] : memref<128x128xf32, #tpu.memory_space<vmem>>, vector<128x128xf32>
    %cst_7 = arith.constant dense<0.000000e+00> : vector<16x128xf32>
    %7 = tpu.matmul %1, %6, %cst_7 {dimension_numbers = #tpu.dot_dimension_numbers<[1], [0], [0], [1], [0, 0, 1, 1], [], []>} : vector<16x128xf32>, vector<128x128xf32>, vector<16x128xf32> -> vector<16x128xf32>
    %c0_8 = arith.constant 0 : index
    %c0_9 = arith.constant 0 : index
    %8 = vector.load %arg4[%c0_8, %c0_9] : memref<1x128xf32, #tpu.memory_space<vmem>>, vector<1x128xf32>
    %9 = arith.subf %8, %5 : vector<1x128xf32>
    %10 = vector.broadcast %9 : vector<1x128xf32> to vector<16x128xf32>
    %11 = arith.addf %7, %10 : vector<16x128xf32>
    %c0_10 = arith.constant 0 : index
    %c0_11 = arith.constant 0 : index
    %c0_12 = arith.constant 0 : index
    %12 = vector.load %arg5[%c0_10, %c0_11, %c0_12] : memref<1x16x128xf32, #tpu.memory_space<vmem>>, vector<1x16x128xf32>
    %13 = vector.shape_cast %12 : vector<1x16x128xf32> to vector<16x128xf32>
    %14 = vector.shape_cast %11 : vector<16x128xf32> to vector<1x16x128xf32>
    tpu.vector_store %arg5[%c0_10, %c0_11, %c0_12], %14 {strides = array<i32>} : memref<1x16x128xf32, #tpu.memory_space<vmem>>, vector<1x16x128xf32>,
    return
  }
  func.func @transform_0(%arg0: i32) -> (i32, i32, i32) {
    %c0_i32 = arith.constant 0 : i32
    %c0_i32_0 = arith.constant 0 : i32
    %c0_i32_1 = arith.constant 0 : i32
    return %arg0, %c0_i32, %c0_i32_0 : i32, i32, i32
  }
  func.func @transform_1(%arg0: i32) -> (i32, i32) {
    %c0_i32 = arith.constant 0 : i32
    %c0_i32_0 = arith.constant 0 : i32
    %c0_i32_1 = arith.constant 0 : i32
    return %c0_i32, %c0_i32_0 : i32, i32
  }
  func.func @transform_2(%arg0: i32) -> (i32, i32) {
    %c0_i32 = arith.constant 0 : i32
    %c0_i32_0 = arith.constant 0 : i32
    %c0_i32_1 = arith.constant 0 : i32
    return %c0_i32, %c0_i32_0 : i32, i32
  }
  func.func @transform_3(%arg0: i32) -> (i32, i32) {
    %c0_i32 = arith.constant 0 : i32
    %c0_i32_0 = arith.constant 0 : i32
    %c0_i32_1 = arith.constant 0 : i32
    return %c0_i32, %c0_i32_0 : i32, i32
  }
  func.func @transform_4(%arg0: i32) -> (i32, i32, i32) {
    %c0_i32 = arith.constant 0 : i32
    %c0_i32_0 = arith.constant 0 : i32
    %c0_i32_1 = arith.constant 0 : i32
    return %arg0, %c0_i32, %c0_i32_0 : i32, i32, i32
  }
}

</mosaic_0001>

<llo_original>
// kernel: tpu_custom_call.1
$region0: #{tpu_custom_call.1}
  #allocation0 [shape = 'u32[]', space=smem, size = 0x4, offset = 0x4, fixed_abs, tag = 'smem constant byte address 0x4 - core index']
  #allocation1 [shape = 'u32[144,128]{1,0:T(1,128)}', space=vmem, size = 0x12000, scoped, tag = 'internal scratch']
  %s0 = inlined_call_operand.hbm [shape: f32[4,16,128], index: 0, kind: input, shape index: {}]
  %s1 = inlined_call_operand.hbm [shape: f32[128,128], index: 1, kind: input, shape index: {}]
  %s2 = inlined_call_operand.hbm [shape: f32[128,128], index: 2, kind: input, shape index: {}]
  %s3 = inlined_call_operand.vmem [shape: f32[1,128], index: 3, kind: input, shape index: {}]
  %s4 = inlined_call_operand.hbm [shape: f32[4,16,128], index: 4, kind: output, shape index: {}]
  %s5 = sld [smem:[#allocation0]]
  $region61: #{tpu_custom_call.1} parent=0
    _
  %s7 = ssub.s32 1, %s5
  %s8 = scalar_select 0, %s7, %s5
  $region1: #{tpu_custom_call.1} parent=0
    #allocation2 [shape = 'u8[16384]{0}', space=vmem, size = 0x4000, scoped, tag = 'input window, operand 0']
    #allocation3 [shape = 's32[2]{0}', space=sflag, size = 0x8, scoped, tag = 'scoped memory for tpu_custom_call.1']
    #allocation4 [shape = 's32[2]{0}', space=sflag, size = 0x8, scoped, tag = 'scoped memory for tpu_custom_call.1']
    #allocation5 [shape = 'u8[65536]{0}', space=vmem, size = 0x10000, scoped, tag = 'input window, operand 1, single buffered']
    #allocation6 [shape = 's32[1]{0}', space=sflag, size = 0x4, scoped, tag = 'scoped memory for tpu_custom_call.1']
    #allocation7 [shape = 'u8[65536]{0}', space=vmem, size = 0x10000, scoped, tag = 'input window, operand 2, single buffered']
    #allocation8 [shape = 'u8[16384]{0}', space=vmem, size = 0x4000, scoped, tag = 'output window, operand 0']
    %9 = vsyncpa [#allocation3], 0
    %s10 = scalar_lea.sflag [#allocation3], 1
    %11 = vsyncpa %s10, 0
    %12 = vsyncpa [#allocation6], 0
    %13 = vsyncpa [#allocation4], 0
    %s14 = scalar_lea.sflag [#allocation4], 1
    %15 = vsyncpa %s14, 0
    loop: start=0, step=1, limit=6
    $region2: #{tpu_custom_call.1} parent=1 // loop_pre_header
      _
    $region3: #{tpu_custom_call.1} parent=1 // loop_header
      %s17 = sphi 0, %s21
      %p18 = scmp.ge.s32.totalorder %s17, 6
      %s27 = sphi 0, %s29
      %s30 = sphi 0, %s27
      %s31 = sphi 0, %s30
      %s47 = sphi 0, %s31
      %s51 = sphi 0, %s51
      %s53 = sphi 0, %s51
      %s54 = sphi 0, %s53
      %s68 = sphi 0, %s54
      %s72 = sphi 0, %s72
      %s74 = sphi 0, %s72
      %s75 = sphi 0, %s74
      %s89 = sphi 0, %s75
      %s93 = sphi 0, %s93
      %s95 = sphi 0, %s93
      %s96 = sphi 0, %s95
      %s110 = sphi 0, %s96
      %s116 = sphi 0, %s118
      %s119 = sphi 0, %s116
      %s120 = sphi 0, %s119
      %s136 = sphi 0, %s120
    $region4: #{tpu_custom_call.1} parent=1 // loop_header_branch
      %20 = sbr.rel (%p18) target = $region8
    $region5: #{tpu_custom_call.1} parent=1 // loop_body
      %s22 = ssub.s32 %s17, 1
      %s23 = ssub.s32 %s17, 2
      %s24 = sadd.s32 %s17, 1
      %s25 = ssub.s32 %s17, %s24
      %p26 = scmp.eq.s32.totalorder %s25, 0
      %s28 = sadd.s32 %s27, 1
      %s29 = scalar_select %p26, %s27, %s28
      %p32 = pneg %p26
      %p33 = scmp.eq.s32.totalorder %s17, 3
      %p34 = por %p32, %p33
      %p35 = scmp.ne.s32.totalorder %s27, %s30
      %p36 = scmp.eq.s32.totalorder %s17, 0
      %p37 = por %p35, %p36
      %p38 = scmp.ne.s32.totalorder %s27, %s30
      %p39 = scmp.eq.s32.totalorder %s22, 3
      %p40 = por %p38, %p39
      %p41 = scmp.ne.s32.totalorder %s30, %s31
      %p42 = scmp.eq.s32.totalorder %s22, 0
      %p43 = por %p41, %p42
      %p44 = scmp.ne.s32.totalorder %s30, %s31
      %p45 = scmp.eq.s32.totalorder %s23, 3
      %p46 = por %p44, %p45
      %p48 = scmp.ne.s32.totalorder %s31, %s47
      %p49 = scmp.eq.s32.totalorder %s23, 0
      %p50 = por %p48, %p49
      %s52 = sadd.s32 %s51, 1
      %p55 = scmp.eq.s32.totalorder %s17, 3
      %p56 = scmp.ne.s32.totalorder %s51, %s53
      %p57 = scmp.eq.s32.totalorder %s17, 0
      %p58 = por %p56, %p57
      %p59 = scmp.ne.s32.totalorder %s51, %s53
      %p60 = scmp.eq.s32.totalorder %s22, 3
      %p61 = por %p59, %p60
      %p62 = scmp.ne.s32.totalorder %s53, %s54
      %p63 = scmp.eq.s32.totalorder %s22, 0
      %p64 = por %p62, %p63
      %p65 = scmp.ne.s32.totalorder %s53, %s54
      %p66 = scmp.eq.s32.totalorder %s23, 3
      %p67 = por %p65, %p66
      %p69 = scmp.ne.s32.totalorder %s54, %s68
      %p70 = scmp.eq.s32.totalorder %s23, 0
      %p71 = por %p69, %p70
      %s73 = sadd.s32 %s72, 1
      %p76 = scmp.eq.s32.totalorder %s17, 3
      %p77 = scmp.ne.s32.totalorder %s72, %s74
      %p78 = scmp.eq.s32.totalorder %s17, 0
      %p79 = por %p77, %p78
      %p80 = scmp.ne.s32.totalorder %s72, %s74
      %p81 = scmp.eq.s32.totalorder %s22, 3
      %p82 = por %p80, %p81
      %p83 = scmp.ne.s32.totalorder %s74, %s75
      %p84 = scmp.eq.s32.totalorder %s22, 0
      %p85 = por %p83, %p84
      %p86 = scmp.ne.s32.totalorder %s74, %s75
      %p87 = scmp.eq.s32.totalorder %s23, 3
      %p88 = por %p86, %p87
      %p90 = scmp.ne.s32.totalorder %s75, %s89
      %p91 = scmp.eq.s32.totalorder %s23, 0
      %p92 = por %p90, %p91
      %s94 = sadd.s32 %s93, 1
      %p97 = scmp.eq.s32.totalorder %s17, 3
      %p98 = scmp.ne.s32.totalorder %s93, %s95
      %p99 = scmp.eq.s32.totalorder %s17, 0
      %p100 = por %p98, %p99
      %p101 = scmp.ne.s32.totalorder %s93, %s95
      %p102 = scmp.eq.s32.totalorder %s22, 3
      %p103 = por %p101, %p102
      %p104 = scmp.ne.s32.totalorder %s95, %s96
      %p105 = scmp.eq.s32.totalorder %s22, 0
      %p106 = por %p104, %p105
      %p107 = scmp.ne.s32.totalorder %s95, %s96
      %p108 = scmp.eq.s32.totalorder %s23, 3
      %p109 = por %p107, %p108
      %p111 = scmp.ne.s32.totalorder %s96, %s110
      %p112 = scmp.eq.s32.totalorder %s23, 0
      %p113 = por %p111, %p112
      %s114 = ssub.s32 %s17, %s24
      %p115 = scmp.eq.s32.totalorder %s114, 0
      %s117 = sadd.s32 %s116, 1
      %s118 = scalar_select %p115, %s116, %s117
      %p121 = pneg %p115
      %p122 = scmp.eq.s32.totalorder %s17, 3
      %p123 = por %p121, %p122
      %p124 = scmp.ne.s32.totalorder %s116, %s119
      %p125 = scmp.eq.s32.totalorder %s17, 0
      %p126 = por %p124, %p125
      %p127 = scmp.ne.s32.totalorder %s116, %s119
      %p128 = scmp.eq.s32.totalorder %s22, 3
      %p129 = por %p127, %p128
      %p130 = scmp.ne.s32.totalorder %s119, %s120
      %p131 = scmp.eq.s32.totalorder %s22, 0
      %p132 = por %p130, %p131
      %p133 = scmp.ne.s32.totalorder %s119, %s120
      %p134 = scmp.eq.s32.totalorder %s23, 3
      %p135 = por %p133, %p134
      %p137 = scmp.ne.s32.totalorder %s120, %s136
      %p138 = scmp.eq.s32.totalorder %s23, 0
      %p139 = por %p137, %p138
      %p140 = scmp.le.s32.totalorder 1, %s17
      %p141 = scmp.lt.s32.totalorder %s17, 5
      %p142 = pnand %p140, %p141
      %p143 = pneg %p142
      // Predicated region
      $region9: #{tpu_custom_call.1} parent=5 // pred_check
        _
      $region10: #{tpu_custom_call.1} parent=5 // pred_check_branch
        %145 = sbr.rel (%p142) target = $region12
      $region11: #{tpu_custom_call.1} parent=5 // pred_region
        %s146 = ssub.s32 %s17, 1
        // Predicated region
        $region13: #{tpu_custom_call.1} parent=11 // pred_check
          %p147 = pneg %p64
        $region14: #{tpu_custom_call.1} parent=11 // pred_check_branch
          %149 = sbr.rel (%p147) target = $region16
        $region15: #{tpu_custom_call.1} parent=11 // pred_region
          %s151 = ssub.s32 2048, 2048
          %152 = vsyncadd [#allocation6], %s151
          %s153 = sshll.u32 [#allocation5], 4
          %s154 = int_to_ptr.vmem [resolvable:$true] %s153
          %159 = dma.hbm_to_vmem [thread:$0]  %s1, 2048, %s154, [#allocation6], 128, 128, 8
        $region16: #{tpu_custom_call.1} parent=11 // pred_fallthru
          _
        // Predicated region
        $region17: #{tpu_custom_call.1} parent=11 // pred_check
          %p160 = pneg %p85
        $region18: #{tpu_custom_call.1} parent=11 // pred_check_branch
          %162 = sbr.rel (%p160) target = $region20
        $region19: #{tpu_custom_call.1} parent=11 // pred_region
          %s164 = ssub.s32 2048, 2048
          %165 = vsyncadd [#allocation6], %s164
          %s166 = sshll.u32 [#allocation7], 4
          %s167 = int_to_ptr.vmem [resolvable:$true] %s166
          %172 = dma.hbm_to_vmem [thread:$0]  %s2, 2048, %s167, [#allocation6], 128, 128, 8
        $region20: #{tpu_custom_call.1} parent=11 // pred_fallthru
          _
        // Predicated region
        $region21: #{tpu_custom_call.1} parent=11 // pred_check
          %p173 = pneg %p106
        $region22: #{tpu_custom_call.1} parent=11 // pred_check_branch
          %175 = sbr.rel (%p173) target = $region24
        $region23: #{tpu_custom_call.1} parent=11 // pred_region
          _
        $region24: #{tpu_custom_call.1} parent=11 // pred_fallthru
          _
      $region12: #{tpu_custom_call.1} parent=5 // pred_fallthru
        _
      %p176 = scmp.lt.s32.totalorder %s17, 4
      // Predicated region
      $region25: #{tpu_custom_call.1} parent=5 // pred_check
        %p177 = pneg %p176
      $region26: #{tpu_custom_call.1} parent=5 // pred_check_branch
        %179 = sbr.rel (%p177) target = $region28
      $region27: #{tpu_custom_call.1} parent=5 // pred_region
        // Predicated region
        $region29: #{tpu_custom_call.1} parent=27 // pred_check
          %p180 = pneg %p37
        $region30: #{tpu_custom_call.1} parent=27 // pred_check_branch
          %182 = sbr.rel (%p180) target = $region32
        $region31: #{tpu_custom_call.1} parent=27 // pred_region
          %s183 = sand.u32 %s27, 1
          %s184 = scalar_lea.sflag [#allocation3], %s183
          %s185 = sand.u32 %s27, 1
          %s186 = smul.addr %s185, 16
          %s187 = scalar_lea.vmem [#allocation2], %s186
          %s189 = ssub.s32 256, 256
          %190 = vsyncadd %s184, %s189
          %s191 = smul.addr %s17, 2
          %s192 = smul.addr %s191, 128
          %s193 = scalar_lea.hbm %s0, %s192
          %s194 = sshll.u32 %s187, 4
          %s195 = int_to_ptr.vmem [resolvable:$true] %s194
          %200 = dma.hbm_to_vmem [thread:$0]  %s193, 256, %s195, %s184, 128, 128, 8
        $region32: #{tpu_custom_call.1} parent=27 // pred_fallthru
          _
      $region28: #{tpu_custom_call.1} parent=5 // pred_fallthru
        _
      %p201 = scmp.le.s32.totalorder 1, %s17
      %p202 = scmp.lt.s32.totalorder %s17, 5
      %p203 = pnand %p201, %p202
      %p204 = pneg %p203
      // Predicated region
      $region33: #{tpu_custom_call.1} parent=5 // pred_check
        _
      $region34: #{tpu_custom_call.1} parent=5 // pred_check_branch
        %206 = sbr.rel (%p203) target = $region36
      $region35: #{tpu_custom_call.1} parent=5 // pred_region
        %s207 = ssub.s32 %s17, 1
        %s208 = sand.u32 %s30, 1
        %s209 = scalar_lea.sflag [#allocation3], %s208
        %s210 = sand.u32 %s30, 1
        %s211 = smul.addr %s210, 16
        %s212 = scalar_lea.vmem [#allocation2], %s211
        // Predicated region
        $region37: #{tpu_custom_call.1} parent=35 // pred_check
          %p213 = pneg %p43
        $region38: #{tpu_custom_call.1} parent=35 // pred_check_branch
          %215 = sbr.rel (%p213) target = $region40
        $region39: #{tpu_custom_call.1} parent=35 // pred_region
          %216 = dma.done %s209, 256
        $region40: #{tpu_custom_call.1} parent=35 // pred_fallthru
          _
        // Predicated region
        $region41: #{tpu_custom_call.1} parent=35 // pred_check
          %p217 = pneg %p64
        $region42: #{tpu_custom_call.1} parent=35 // pred_check_branch
          %219 = sbr.rel (%p217) target = $region44
        $region43: #{tpu_custom_call.1} parent=35 // pred_region
          %220 = dma.done [#allocation6], 2048
        $region44: #{tpu_custom_call.1} parent=35 // pred_fallthru
          _
        // Predicated region
        $region45: #{tpu_custom_call.1} parent=35 // pred_check
          %p221 = pneg %p85
        $region46: #{tpu_custom_call.1} parent=35 // pred_check_branch
          %223 = sbr.rel (%p221) target = $region48
        $region47: #{tpu_custom_call.1} parent=35 // pred_region
          %224 = dma.done [#allocation6], 2048
        $region48: #{tpu_custom_call.1} parent=35 // pred_fallthru
          _
        %s225 = sand.u32 %s30, 1
        %s226 = scalar_lea.sflag [#allocation3], %s225
        %s227 = sand.u32 %s30, 1
        %s228 = smul.addr %s227, 16
        %s229 = scalar_lea.vmem [#allocation2], %s228
        %p230 = pneg %p43
        %p231 = pneg %p40
        %p232 = pneg %p64
        %p233 = pneg %p61
        %p234 = pneg %p85
        %p235 = pneg %p82
        %p236 = pneg %p106
        %p237 = pneg %p103
        %p238 = pneg %p132
        %p239 = pneg %p129
        %s240 = sand.u32 %s119, 1
        %s241 = scalar_lea.sflag [#allocation4], %s240
        %s242 = sand.u32 %s119, 1
        %s243 = smul.addr %s242, 16
        %s244 = scalar_lea.vmem [#allocation8], %s243
        %v245 = vld [vmem:[%s212] sm:$0xff]
        %v246 = vld [vmem:[%s212 + $0x8] sm:$0xff]
        %v247 = vadd.f32 %v245, %v246
        %v248 = vrot.slane %v247, 4
        %v249 = vadd.f32 %v247, %v248
        %v250 = vrot.slane %v249, 2
        %v251 = vadd.f32 %v249, %v250
        %v252 = vrot.slane %v251, 1
        %v253 = vadd.f32 %v251, %v252
        %v254 = vld [vmem:[#allocation7] sm:$0xff]
        %v255 = vld [vmem:[#allocation7 + $0x8] sm:$0xff]
        %v256 = vld [vmem:[#allocation7 + $0x10] sm:$0xff]
        %v257 = vld [vmem:[#allocation7 + $0x18] sm:$0xff]
        %v258 = vld [vmem:[#allocation7 + $0x20] sm:$0xff]
        %v259 = vld [vmem:[#allocation7 + $0x28] sm:$0xff]
        %v260 = vld [vmem:[#allocation7 + $0x30] sm:$0xff]
        %v261 = vld [vmem:[#allocation7 + $0x38] sm:$0xff]
        %v262 = vld [vmem:[#allocation7 + $0x40] sm:$0xff]
        %v263 = vld [vmem:[#allocation7 + $0x48] sm:$0xff]
        %v264 = vld [vmem:[#allocation7 + $0x50] sm:$0xff]
        %v265 = vld [vmem:[#allocation7 + $0x58] sm:$0xff]
        %v266 = vld [vmem:[#allocation7 + $0x60] sm:$0xff]
        %v267 = vld [vmem:[#allocation7 + $0x68] sm:$0xff]
        %v268 = vld [vmem:[#allocation7 + $0x70] sm:$0xff]
        %v269 = vld [vmem:[#allocation7 + $0x78] sm:$0xff]
        %270 = vmatprep.subr.mxu0 0.0
        %271 = vmatpush1.msra.mxu0 %v254
        %272 = vmatprep.subr.mxu0 0.0
        %273 = vmatpush1.msra.mxu0 %v255
        %274 = vmatprep.subr.mxu0 0.0
        %275 = vmatpush1.msra.mxu0 %v256
        %276 = vmatprep.subr.mxu0 0.0
        %277 = vmatpush1.msra.mxu0 %v257
        %278 = vmatprep.subr.mxu0 0.0
        %279 = vmatpush1.msra.mxu0 %v258
        %280 = vmatprep.subr.mxu0 0.0
        %281 = vmatpush1.msra.mxu0 %v259
        %282 = vmatprep.subr.mxu0 0.0
        %283 = vmatpush1.msra.mxu0 %v260
        %284 = vmatprep.subr.mxu0 0.0
        %285 = vmatpush1.msra.mxu0 %v261
        %286 = vmatprep.subr.mxu0 0.0
        %287 = vmatpush1.msra.mxu0 %v262
        %288 = vmatprep.subr.mxu0 0.0
        %289 = vmatpush1.msra.mxu0 %v263
        %290 = vmatprep.subr.mxu0 0.0
        %291 = vmatpush1.msra.mxu0 %v264
        %292 = vmatprep.subr.mxu0 0.0
        %293 = vmatpush1.msra.mxu0 %v265
        %294 = vmatprep.subr.mxu0 0.0
        %295 = vmatpush1.msra.mxu0 %v266
        %296 = vmatprep.subr.mxu0 0.0
        %297 = vmatpush1.msra.mxu0 %v267
        %298 = vmatprep.subr.mxu0 0.0
        %299 = vmatpush1.msra.mxu0 %v268
        %300 = vmatprep.subr.mxu0 0.0
        %301 = vmatpush1.msra.mxu0 %v269
        %302 = vmatprep.subr.mxu0 0.0
        %303 = vmatpush1.msra.mxu0 0.0
        %304 = vmatprep.subr.mxu0 0.0
        %305 = vmatpush1.msra.mxu0 0.0
        %306 = vmatprep.subr.mxu0 0.0
        %307 = vmatpush1.msra.mxu0 0.0
        %308 = vmatprep.subr.mxu0 0.0
        %309 = vmatpush1.msra.mxu0 0.0
        %310 = vmatprep.subr.mxu0 0.0
        %311 = vmatpush1.msra.mxu0 0.0
        %312 = vmatprep.subr.mxu0 0.0
        %313 = vmatpush1.msra.mxu0 0.0
        %314 = vmatprep.subr.mxu0 0.0
        %315 = vmatpush1.msra.mxu0 0.0
        %316 = vmatprep.subr.mxu0 0.0
        %317 = vmatpush1.msra.mxu0 0.0
        %318 = vmatprep.subr.mxu0 0.0
        %319 = vmatpush1.msra.mxu0 0.0
        %320 = vmatprep.subr.mxu0 0.0
        %321 = vmatpush1.msra.mxu0 0.0
        %322 = vmatprep.subr.mxu0 0.0
        %323 = vmatpush1.msra.mxu0 0.0
        %324 = vmatprep.subr.mxu0 0.0
        %325 = vmatpush1.msra.mxu0 0.0
        %326 = vmatprep.subr.mxu0 0.0
        %327 = vmatpush1.msra.mxu0 0.0
        %328 = vmatprep.subr.mxu0 0.0
        %329 = vmatpush1.msra.mxu0 0.0
        %330 = vmatprep.subr.mxu0 0.0
        %331 = vmatpush1.msra.mxu0 0.0
        %332 = vmatprep.subr.mxu0 0.0
        %333 = vmatpush1.msra.mxu0 0.0
        %334 = vmatprep.mubr.f32.mxu0 0.0
        %335 = vmatmul.mubr.f32.gmra.mrb[0].mxu0 %v253
        %v336 = vpop.f32.mrb[0].mxu0
        %v337 = vadd.f32 0.0, %v336
        %v338 = vpop.f32.mrb[0].mxu0
        %339 = vdwg.mxu0
        %v340 = vld [vmem:[#allocation5] sm:$0xff]
        %v341 = vld [vmem:[#allocation5 + $0x8] sm:$0xff]
        %v342 = vld [vmem:[#allocation5 + $0x10] sm:$0xff]
        %v343 = vld [vmem:[#allocation5 + $0x18] sm:$0xff]
        %v344 = vld [vmem:[#allocation5 + $0x20] sm:$0xff]
        %v345 = vld [vmem:[#allocation5 + $0x28] sm:$0xff]
        %v346 = vld [vmem:[#allocation5 + $0x30] sm:$0xff]
        %v347 = vld [vmem:[#allocation5 + $0x38] sm:$0xff]
        %v348 = vld [vmem:[#allocation5 + $0x40] sm:$0xff]
        %v349 = vld [vmem:[#allocation5 + $0x48] sm:$0xff]
        %v350 = vld [vmem:[#allocation5 + $0x50] sm:$0xff]
        %v351 = vld [vmem:[#allocation5 + $0x58] sm:$0xff]
        %v352 = vld [vmem:[#allocation5 + $0x60] sm:$0xff]
        %v353 = vld [vmem:[#allocation5 + $0x68] sm:$0xff]
        %v354 = vld [vmem:[#allocation5 + $0x70] sm:$0xff]
        %v355 = vld [vmem:[#allocation5 + $0x78] sm:$0xff]
        %v356 = vld [vmem:[%s3] sm:$0x1]
        %v357 = vsub.f32 %v356, %v337
        %v359 = vlaneseq
        %v360 = vshrl.u32 %v359, 7
        %v361 = vsub.s32 0, %v360
        %v362 = vrot.slane %v357, %v361
        %364 = vmatprep.subr.mxu0 0.0
        %365 = vmatpush1.msra.mxu0 %v340
        %366 = vmatprep.subr.mxu0 0.0
        %367 = vmatpush1.msra.mxu0 %v341
        %368 = vmatprep.subr.mxu0 0.0
        %369 = vmatpush1.msra.mxu0 %v342
        %370 = vmatprep.subr.mxu0 0.0
        %371 = vmatpush1.msra.mxu0 %v343
        %372 = vmatprep.subr.mxu0 0.0
        %373 = vmatpush1.msra.mxu0 %v344
        %374 = vmatprep.subr.mxu0 0.0
        %375 = vmatpush1.msra.mxu0 %v345
        %376 = vmatprep.subr.mxu0 0.0
        %377 = vmatpush1.msra.mxu0 %v346
        %378 = vmatprep.subr.mxu0 0.0
        %379 = vmatpush1.msra.mxu0 %v347
        %380 = vmatprep.subr.mxu0 0.0
        %381 = vmatpush1.msra.mxu0 %v348
        %382 = vmatprep.subr.mxu0 0.0
        %383 = vmatpush1.msra.mxu0 %v349
        %384 = vmatprep.subr.mxu0 0.0
        %385 = vmatpush1.msra.mxu0 %v350
        %386 = vmatprep.subr.mxu0 0.0
        %387 = vmatpush1.msra.mxu0 %v351
        %388 = vmatprep.subr.mxu0 0.0
        %389 = vmatpush1.msra.mxu0 %v352
        %390 = vmatprep.subr.mxu0 0.0
        %391 = vmatpush1.msra.mxu0 %v353
        %392 = vmatprep.subr.mxu0 0.0
        %393 = vmatpush1.msra.mxu0 %v354
        %394 = vmatprep.subr.mxu0 0.0
        %395 = vmatpush1.msra.mxu0 %v355
        %396 = vmatprep.subr.mxu0 0.0
        %397 = vmatpush1.msra.mxu0 0.0
        %398 = vmatprep.subr.mxu0 0.0
        %399 = vmatpush1.msra.mxu0 0.0
        %400 = vmatprep.subr.mxu0 0.0
        %401 = vmatpush1.msra.mxu0 0.0
        %402 = vmatprep.subr.mxu0 0.0
        %403 = vmatpush1.msra.mxu0 0.0
        %404 = vmatprep.subr.mxu0 0.0
        %405 = vmatpush1.msra.mxu0 0.0
        %406 = vmatprep.subr.mxu0 0.0
        %407 = vmatpush1.msra.mxu0 0.0
        %408 = vmatprep.subr.mxu0 0.0
        %409 = vmatpush1.msra.mxu0 0.0
        %410 = vmatprep.subr.mxu0 0.0
        %411 = vmatpush1.msra.mxu0 0.0
        %412 = vmatprep.subr.mxu0 0.0
        %413 = vmatpush1.msra.mxu0 0.0
        %414 = vmatprep.subr.mxu0 0.0
        %415 = vmatpush1.msra.mxu0 0.0
        %416 = vmatprep.subr.mxu0 0.0
        %417 = vmatpush1.msra.mxu0 0.0
        %418 = vmatprep.subr.mxu0 0.0
        %419 = vmatpush1.msra.mxu0 0.0
        %420 = vmatprep.subr.mxu0 0.0
        %421 = vmatpush1.msra.mxu0 0.0
        %422 = vmatprep.subr.mxu0 0.0
        %423 = vmatpush1.msra.mxu0 0.0
        %424 = vmatprep.subr.mxu0 0.0
        %425 = vmatpush1.msra.mxu0 0.0
        %426 = vmatprep.subr.mxu0 0.0
        %427 = vmatpush1.msra.mxu0 0.0
        %428 = vmatprep.mubr.f32.mxu0 0.0
        %429 = vmatmul.mubr.f32.gmra.mrb[0].mxu0 %v245
        %v430 = vpop.f32.mrb[0].mxu0
        %v431 = vadd.f32 %v362, %v430
        %v432 = vpop.f32.mrb[0].mxu0
        %433 = vmatprep.mubr.f32.mxu0 0.0
        %434 = vmatmul.mubr.f32.gmra.mrb[0].mxu0 %v246
        %v435 = vpop.f32.mrb[0].mxu0
        %v436 = vadd.f32 %v362, %v435
        %v437 = vpop.f32.mrb[0].mxu0
        %438 = vdwg.mxu0
        %439 = vst [vmem:[%s244] sm:$0xff] %v431
        %440 = vst [vmem:[%s244 + $0x8] sm:$0xff] %v436
        %s441 = sand.u32 %s119, 1
        %s442 = scalar_lea.sflag [#allocation4], %s441
        %s443 = sand.u32 %s119, 1
        %s444 = smul.addr %s443, 16
        %s445 = scalar_lea.vmem [#allocation8], %s444
        // Predicated region
        $region49: #{tpu_custom_call.1} parent=35 // pred_check
          %p446 = pneg %p129
        $region50: #{tpu_custom_call.1} parent=35 // pred_check_branch
          %448 = sbr.rel (%p446) target = $region52
        $region51: #{tpu_custom_call.1} parent=35 // pred_region
          %s450 = ssub.s32 256, 256
          %451 = vsyncadd %s442, %s450
          %s452 = smul.addr %s22, 2
          %s453 = smul.addr %s452, 128
          %s454 = scalar_lea.hbm %s4, %s453
          %s455 = sshll.u32 %s445, 4
          %s456 = int_to_ptr.vmem [resolvable:$true] %s455
          %461 = dma.vmem_to_hbm [thread:$0]  %s456, 256, %s454, %s442, 128, 128, 8
        $region52: #{tpu_custom_call.1} parent=35 // pred_fallthru
          _
      $region36: #{tpu_custom_call.1} parent=5 // pred_fallthru
        _
      %p462 = scmp.le.s32.totalorder 2, %s17
      // Predicated region
      $region53: #{tpu_custom_call.1} parent=5 // pred_check
        %p463 = pneg %p462
      $region54: #{tpu_custom_call.1} parent=5 // pred_check_branch
        %465 = sbr.rel (%p463) target = $region56
      $region55: #{tpu_custom_call.1} parent=5 // pred_region
        %s466 = ssub.s32 %s17, 2
        // Predicated region
        $region57: #{tpu_custom_call.1} parent=55 // pred_check
          %p467 = pneg %p135
        $region58: #{tpu_custom_call.1} parent=55 // pred_check_branch
          %469 = sbr.rel (%p467) target = $region60
        $region59: #{tpu_custom_call.1} parent=55 // pred_region
          %s470 = sand.u32 %s120, 1
          %s471 = scalar_lea.sflag [#allocation4], %s470
          %s472 = sand.u32 %s120, 1
          %s473 = smul.addr %s472, 16
          %s474 = scalar_lea.vmem [#allocation8], %s473
          %475 = dma.done %s471, 256
        $region60: #{tpu_custom_call.1} parent=55 // pred_fallthru
          _
      $region56: #{tpu_custom_call.1} parent=5 // pred_fallthru
        _
    $region6: #{tpu_custom_call.1} parent=1 // loop_footer
      %s21 = sadd.s32 1, %s17
    $region7: #{tpu_custom_call.1} parent=1 // loop_footer_branch
      %16 = sbr.rel target = $region3
    $region8: #{tpu_custom_call.1} parent=1 // loop_exit
      _
    %476 = vsyncpa [#allocation3], 1
    %s477 = scalar_lea.sflag [#allocation3], 1
    %478 = vsyncpa %s477, 1
    %479 = vsyncpa [#allocation6], 1
    %480 = vsyncpa [#allocation4], 1
    %s481 = scalar_lea.sflag [#allocation4], 1
    %482 = vsyncpa %s481, 1

</llo_original>
